<compile_context>
chip_gen: v7x
topology: tpu7x:2x2x1
jax: 0.10.0
libtpu: 0.0.40
codegen_flags: <defaults>
</compile_context>

<pallas_src>
import math
from copy import deepcopy

import numpy as np
import jax
import jax.numpy as jnp
from jax.experimental import pallas as pl
from jax.experimental.pallas import tpu as pltpu


# ----------------------------------------------------------------------------
# Color structure (identical logic to the PyTorch module, pure Python/numpy)
# ----------------------------------------------------------------------------
def create_colored_matrix(input_generators, output_generators):
    def dfs(i, j, colors, color_idx):
        colors[(i, j)] = color_idx
        for k in range(len(input_generators)):
            i_ = input_generators[k][i]
            j_ = output_generators[k][j]
            if (i_, j_) not in colors:
                dfs(i_, j_, colors, color_idx)

    assert len(input_generators) == len(output_generators)
    assert len(input_generators) > 0
    color_idx = 0
    colors = {}
    for i in range(len(input_generators[0])):
        for j in range(len(output_generators[0])):
            if (i, j) not in colors:
                dfs(i, j, colors, color_idx)
                color_idx += 1
    return colors


def create_colored_vector(output_generators):
    def dfs(i, colors, color_idx):
        colors[i] = color_idx
        for k in range(len(output_generators)):
            i_ = output_generators[k][i]
            if i_ not in colors:
                dfs(i_, colors, color_idx)

    assert len(output_generators) > 0
    color_idx = 0
    colors = {}
    for i in range(len(output_generators[0])):
        if i not in colors:
            dfs(i, colors, color_idx)
            color_idx += 1
    return colors


# ----------------------------------------------------------------------------
# Static tiling helpers (all decisions are on static Python shapes)
# ----------------------------------------------------------------------------
def _round_up(x, m):
    return ((x + m - 1) // m) * m


def _pick_tile(dim_padded, cap):
    """Largest multiple-of-128 divisor of dim_padded that is <= cap (dim_padded % 128 == 0)."""
    m = dim_padded // 128
    best = 128
    for f in range(1, m + 1):
        if m % f == 0 and f * 128 <= cap:
            best = f * 128
    return best


def _pick_tm(B):
    """Adaptive batch tile: multiple of 16 (bf16 sublane packing), <=12.5% padding waste."""
    for tm in (512, 256, 128, 64, 32, 16):
        Bp = _round_up(B, tm)
        if Bp - B <= max(0.125 * B, 0.0):
            return tm, Bp
    tm = 16
    return tm, _round_up(B, tm)


_SINGLE_PASS_K_MAX = 2048          # whole-K single MXU pass when Kp <= this
_TN_CAP = 512
_TK_CAP = 1024
_VMEM_LIMIT = 48 * 1024 * 1024     # safe across v5e/v6e (128 MiB) and v7x (64 MiB / TC)


# ----------------------------------------------------------------------------
# Pallas kernels
# ----------------------------------------------------------------------------
def _matmul_bias_single_pass_kernel(x_ref, wt_ref, b_ref, o_ref):
    # Whole K reduction in one MXU pass: no accumulator scratch, no pl.when machinery.
    acc = jnp.dot(x_ref[...], wt_ref[...], preferred_element_type=jnp.float32)
    o_ref[...] = (acc + b_ref[...]).astype(o_ref.dtype)


def _matmul_bias_acc_kernel(x_ref, wt_ref, b_ref, o_ref, acc_ref):
    # Large-K fallback: K is the last ("arbitrary") grid axis; f32 VMEM accumulator.
    @pl.when(pl.program_id(2) == 0)
    def _():
        acc_ref[...] = jnp.zeros_like(acc_ref)

    acc_ref[...] += jnp.dot(x_ref[...], wt_ref[...],
                            preferred_element_type=jnp.float32)

    @pl.when(pl.program_id(2) == pl.num_programs(2) - 1)
    def _():
        o_ref[...] = (acc_ref[...] + b_ref[...]).astype(o_ref.dtype)


# ----------------------------------------------------------------------------
# JAX/Pallas port of the PyTorch LinearEquiv module
# ----------------------------------------------------------------------------
class LinearEquivJAX:
    def __init__(self, in_generators, out_generators, in_channels, out_channels,
                 bias=True, key=None, dtype=jnp.float32):
        self.in_features = len(in_generators[0])
        self.out_features = len(out_generators[0])
        self.in_generators = deepcopy(in_generators)
        self.out_generators = deepcopy(out_generators)
        self.in_channels = in_channels
        self.out_channels = out_channels

        self.colors_W = create_colored_matrix(in_generators, out_generators)
        self.colors_b = create_colored_vector(out_generators)
        self.num_colors_W = len(set(self.colors_W.values()))
        self.num_colors_b = len(set(self.colors_b.values()))
        self.num_weights_W = self.num_colors_W * in_channels * out_channels
        self.num_weights_b = self.num_colors_b * out_channels

        K = self.in_features * in_channels
        N = self.out_features * out_channels
        self.K, self.N = K, N

        # --- deterministic parameter init (matches torch bounds) ---
        if key is None:
            key = jax.random.PRNGKey(0)
        kw, kb = jax.random.split(key)
        fan_in = K
        bound = 1.0 / math.sqrt(fan_in)   # kaiming_uniform with a=sqrt(5)
        self.weight = jax.random.uniform(
            kw, (self.num_weights_W,), dtype=dtype, minval=-bound, maxval=bound)
        if bias:
            self.bias = jax.random.uniform(
                kb, (self.num_weights_b,), dtype=dtype, minval=-bound, maxval=bound)
        else:
            self.bias = None

        # --- index tables (same construction as the torch module) ---
        idx_weight = np.zeros((N, K), dtype=np.int32)     # torch orientation (N, K)
        idx_weight_t = np.zeros((K, N), dtype=np.int32)   # transposed -> gather gives W^T
        for i in range(out_channels):
            row_base = i * self.out_features
            for j in range(in_channels):
                col_base = j * self.in_features
                v_base = (i * in_channels + j) * self.num_colors_W
                for k, v in self.colors_W.items():
                    idx_weight[row_base + k[1], col_base + k[0]] = v_base + v
                    idx_weight_t[col_base + k[0], row_base + k[1]] = v_base + v
        self.idx_weight = jnp.asarray(idx_weight)
        self.idx_weight_t = jnp.asarray(idx_weight_t)

        idx_bias = np.zeros((N,), dtype=np.int32)
        for i in range(out_channels):
            row_base = i * self.out_features
            v_base = i * self.num_colors_b
            for k, v in self.colors_b.items():
                idx_bias[row_base + k] = v_base + v
        self.idx_bias = jnp.asarray(idx_bias)

        # --- expand + pad shared parameters ONCE (hoisted out of the forward path) ---
        # Pad K/N only to multiples of 128 (lane alignment), not to tile multiples.
        self.Kp = _round_up(K, 128)
        self.Np = _round_up(N, 128)

        Wt = self.weight[self.idx_weight_t]                       # (K, N) == W^T, f32
        self.Wt = Wt                                              # kept f32 for reference
        self.Wt_padded = jnp.pad(
            Wt, ((0, self.Kp - K), (0, self.Np - N))).astype(jnp.bfloat16)   # bf16 MXU operand
        if self.bias is not None:
            b_full = self.bias[self.idx_bias]                     # (N,)
        else:
            b_full = jnp.zeros((N,), dtype=dtype)
        self.b_full = b_full
        self.b_padded = jnp.pad(b_full, (0, self.Np - N)).reshape(1, self.Np)  # f32

    def __call__(self, x):
        assert x.shape[-1] == self.in_features
        assert x.shape[-2] == self.in_channels
        batch_shape = x.shape[:-2]
        B = int(np.prod(batch_shape)) if batch_shape else 1
        K, N, Kp, Np = self.K, self.N, self.Kp, self.Np

        # (B, K) channel-major flatten (same as torch reshape), cast to bf16 for the MXU.
        x2 = x.reshape(B, K).astype(jnp.bfloat16)

        tm, Bp = _pick_tm(B)
        if Bp != B or Kp != K:
            x2 = jnp.pad(x2, ((0, Bp - B), (0, Kp - K)))
        ni = Bp // tm

        # Ensure >= 2 blocks on a parallel axis when the batch has only one tile, so both
        # v7x TensorCores get work (no effect on single-TC v5e/v6e).
        tn_cap = _TN_CAP
        if ni == 1 and Np >= 256:
            tn_cap = min(tn_cap, Np // 2)
        tn = _pick_tile(Np, tn_cap)
        nj = Np // tn

        out_dtype = x.dtype

        if Kp <= _SINGLE_PASS_K_MAX:
            # ---- single-pass kernel: whole K per block, weight resident across batch tiles ----
            grid = (nj, ni)   # batch axis innermost -> weight/bias block index fixed, DMA'd once
            cost = pl.CostEstimate(
                flops=2 * Bp * Np * Kp,
                transcendentals=0,
                bytes_accessed=(2 * nj * Bp * Kp      # x re-streamed once per N tile (bf16)
                                + 2 * Kp * Np         # W^T streamed once (bf16)
                                + 4 * Np              # bias (f32)
                                + 4 * Bp * Np),       # output (f32)
            )
            out = pl.pallas_call(
                _matmul_bias_single_pass_kernel,
                out_shape=jax.ShapeDtypeStruct((Bp, Np), out_dtype),
                grid_spec=pltpu.PrefetchScalarGridSpec(
                    num_scalar_prefetch=0,
                    grid=grid,
                    in_specs=[
                        pl.BlockSpec((tm, Kp), lambda j, i: (i, 0)),
                        pl.BlockSpec((Kp, tn), lambda j, i: (0, j)),   # fixed over inner i
                        pl.BlockSpec((1, tn), lambda j, i: (0, j)),    # bias, fixed over inner i
                    ],
                    out_specs=pl.BlockSpec((tm, tn), lambda j, i: (i, j)),
                ),
                compiler_params=pltpu.CompilerParams(
                    dimension_semantics=("parallel", "parallel"),
                    vmem_limit_bytes=_VMEM_LIMIT,
                ),
                cost_estimate=cost,
            )(x2, self.Wt_padded, self.b_padded)
        else:
            # ---- large-K fallback: tiled reduction grid with f32 accumulator ----
            tk = _pick_tile(Kp, _TK_CAP)
            nk = Kp // tk
            grid = (nj, ni, nk)
            cost = pl.CostEstimate(
                flops=2 * Bp * Np * Kp,
                transcendentals=0,
                bytes_accessed=(2 * nj * Bp * Kp      # x re-streamed per N tile
                                + 2 * ni * Kp * Np    # W^T re-streamed per batch tile
                                + 4 * Np
                                + 4 * Bp * Np),
            )
            out = pl.pallas_call(
                _matmul_bias_acc_kernel,
                out_shape=jax.ShapeDtypeStruct((Bp, Np), out_dtype),
                grid_spec=pltpu.PrefetchScalarGridSpec(
                    num_scalar_prefetch=0,
                    grid=grid,
                    in_specs=[
                        pl.BlockSpec((tm, tk), lambda j, i, k: (i, k)),
                        pl.BlockSpec((tk, tn), lambda j, i, k: (k, j)),
                        pl.BlockSpec((1, tn), lambda j, i, k: (0, j)),   # bias resident over k
                    ],
                    out_specs=pl.BlockSpec((tm, tn), lambda j, i, k: (i, j)),
                    scratch_shapes=[pltpu.VMEM((tm, tn), jnp.float32)],
                ),
                compiler_params=pltpu.CompilerParams(
                    dimension_semantics=("parallel", "parallel", "arbitrary"),
                    vmem_limit_bytes=_VMEM_LIMIT,
                ),
                cost_estimate=cost,
            )(x2, self.Wt_padded, self.b_padded)

        if Bp != B or Np != N:
            out = out[:B, :N]
        return out.reshape(*batch_shape, self.out_channels, self.out_features)


if __name__ == "__main__":
    # Small deterministic example: cyclic-shift symmetry on 8 input / 8 output features.
    n_in, n_out = 8, 8
    in_generators = [[(i + 1) % n_in for i in range(n_in)]]
    out_generators = [[(i + 1) % n_out for i in range(n_out)]]
    in_channels, out_channels = 4, 4
    batch = 2

    key = jax.random.PRNGKey(0)
    k_param, k_x = jax.random.split(key)

    layer = LinearEquivJAX(in_generators, out_generators, in_channels, out_channels,
                           bias=True, key=k_param)

    x = jax.random.normal(k_x, (batch, in_channels, n_in), dtype=jnp.float32)

    y = layer(x)
    y = jax.block_until_ready(y)
    assert y.shape == (batch, out_channels, n_out)

    # Sanity: transposed index-table gather really equals W.T of the original gather.
    W = layer.weight[layer.idx_weight]                      # (N, K), torch orientation
    np.testing.assert_array_equal(np.asarray(W.T), np.asarray(layer.Wt))

    b = layer.b_full
    x2 = x.reshape(batch, in_channels * n_in)

    # Matching-precision reference (bf16 operands, f32 accumulation): tight check.
    y_ref_bf16 = (jnp.dot(x2.astype(jnp.bfloat16), layer.Wt.astype(jnp.bfloat16),
                          preferred_element_type=jnp.float32) + b
                  ).reshape(batch, out_channels, n_out)
    np.testing.assert_allclose(np.asarray(y), np.asarray(y_ref_bf16), rtol=1e-4, atol=1e-5)

    # Full-precision f32 reference: loose check (MXU operands are bf16).
    y_ref = (x2 @ W.T + b).reshape(batch, out_channels, n_out)
    np.testing.assert_allclose(np.asarray(y), np.asarray(y_ref), rtol=2e-2, atol=2e-2)

    print("KERNEL_OK")
</pallas_src>

<mosaic_0001>
module attributes {stable_mosaic.version = 11 : i64} {
  func.func @_matmul_bias_single_pass_kernel(%arg0: i32, %arg1: i32, %arg2: memref<16x128xbf16, #tpu.memory_space<vmem>>, %arg3: memref<128x128xbf16, #tpu.memory_space<vmem>>, %arg4: memref<1x128xf32, #tpu.memory_space<vmem>>, %arg5: memref<16x128xf32, #tpu.memory_space<vmem>>) attributes {dimension_semantics = [#tpu.dimension_semantics<parallel>, #tpu.dimension_semantics<parallel>], iteration_bounds = array<i64: 1, 1>, scalar_prefetch = 0 : i64, scratch_operands = 0 : i64, tpu.core_type = #tpu.core_type<tc>, window_params = [{transform_indices = @transform_0, window_bounds = array<i64: 16, 128>}, {transform_indices = @transform_1, window_bounds = array<i64: 128, 128>}, {transform_indices = @transform_2, window_bounds = array<i64: 1, 128>}, {transform_indices = @transform_3, window_bounds = array<i64: 16, 128>}]} {
    %c0 = arith.constant 0 : index
    %c0_0 = arith.constant 0 : index
    %0 = vector.load %arg2[%c0, %c0_0] : memref<16x128xbf16, #tpu.memory_space<vmem>>, vector<16x128xbf16>
    %c0_1 = arith.constant 0 : index
    %c0_2 = arith.constant 0 : index
    %1 = vector.load %arg3[%c0_1, %c0_2] : memref<128x128xbf16, #tpu.memory_space<vmem>>, vector<128x128xbf16>
    %cst = arith.constant dense<0.000000e+00> : vector<16x128xf32>
    %2 = tpu.matmul %0, %1, %cst {dimension_numbers = #tpu.dot_dimension_numbers<[1], [0], [0], [1], [0, 0, 1, 1], [], []>} : vector<16x128xbf16>, vector<128x128xbf16>, vector<16x128xf32> -> vector<16x128xf32>
    %c0_3 = arith.constant 0 : index
    %c0_4 = arith.constant 0 : index
    %3 = vector.load %arg4[%c0_3, %c0_4] : memref<1x128xf32, #tpu.memory_space<vmem>>, vector<1x128xf32>
    %4 = vector.broadcast %3 : vector<1x128xf32> to vector<16x128xf32>
    %5 = arith.addf %2, %4 : vector<16x128xf32>
    %c0_5 = arith.constant 0 : index
    %c0_6 = arith.constant 0 : index
    %6 = vector.load %arg5[%c0_5, %c0_6] : memref<16x128xf32, #tpu.memory_space<vmem>>, vector<16x128xf32>
    tpu.vector_store %arg5[%c0_5, %c0_6], %5 {strides = array<i32>} : memref<16x128xf32, #tpu.memory_space<vmem>>, vector<16x128xf32>,
    return
  }
  func.func @transform_0(%arg0: i32, %arg1: i32) -> (i32, i32) {
    %c0_i32 = arith.constant 0 : i32
    %c0_i32_0 = arith.constant 0 : i32
    return %arg1, %c0_i32 : i32, i32
  }
  func.func @transform_1(%arg0: i32, %arg1: i32) -> (i32, i32) {
    %c0_i32 = arith.constant 0 : i32
    %c0_i32_0 = arith.constant 0 : i32
    return %c0_i32, %arg0 : i32, i32
  }
  func.func @transform_2(%arg0: i32, %arg1: i32) -> (i32, i32) {
    %c0_i32 = arith.constant 0 : i32
    %c0_i32_0 = arith.constant 0 : i32
    return %c0_i32, %arg0 : i32, i32
  }
  func.func @transform_3(%arg0: i32, %arg1: i32) -> (i32, i32) {
    %c0_i32 = arith.constant 0 : i32
    return %arg1, %arg0 : i32, i32
  }
}

</mosaic_0001>

<llo_original>
// kernel: tpu_custom_call.1
$region0: #{tpu_custom_call.1}
  #allocation0 [shape = 'u32[]', space=smem, size = 0x4, offset = 0x4, fixed_abs, tag = 'smem constant byte address 0x4 - core index']
  #allocation1 [shape = 'u32[144,128]{1,0:T(1,128)}', space=vmem, size = 0x12000, scoped, tag = 'internal scratch']
  %s0 = inlined_call_operand.hbm [shape: bf16[16,128], index: 0, kind: input, shape index: {}]
  %s1 = inlined_call_operand.hbm [shape: bf16[128,128], index: 1, kind: input, shape index: {}]
  %s2 = inlined_call_operand.vmem [shape: f32[1,128], index: 2, kind: input, shape index: {}]
  %s3 = inlined_call_operand.hbm [shape: f32[16,128], index: 3, kind: output, shape index: {}]
  %s4 = sld [smem:[#allocation0]]
  $region30: #{tpu_custom_call.1} parent=0
    _
  %s6 = ssub.s32 1, %s4
  %s7 = scalar_select 0, %s6, %s4
  $region1: #{tpu_custom_call.1} parent=0
    #allocation2 [shape = 'u8[4096]{0}', space=vmem, size = 0x1000, scoped, tag = 'input window, operand 0, single buffered']
    #allocation3 [shape = 's32[1]{0}', space=sflag, size = 0x4, scoped, tag = 'scoped memory for tpu_custom_call.1']
    #allocation4 [shape = 's32[1]{0}', space=sflag, size = 0x4, scoped, tag = 'scoped memory for tpu_custom_call.1']
    #allocation5 [shape = 'u8[32768]{0}', space=vmem, size = 0x8000, scoped, tag = 'input window, operand 1, single buffered']
    #allocation6 [shape = 's32[1]{0}', space=sflag, size = 0x4, scoped, tag = 'scoped memory for tpu_custom_call.1']
    #allocation7 [shape = 'u8[8192]{0}', space=vmem, size = 0x2000, scoped, tag = 'output window, operand 0, single buffered']
    %8 = vsyncpa [#allocation3], 0
    %9 = vsyncpa [#allocation6], 0
    %10 = vsyncpa [#allocation4], 0
    // Predicated region
    $region2: #{tpu_custom_call.1} parent=1 // pred_check
      _
    $region3: #{tpu_custom_call.1} parent=1 // pred_check_branch
      %12 = sbr.rel (0) target = $region5
    $region4: #{tpu_custom_call.1} parent=1 // pred_region
      %s14 = ssub.s32 128, 128
      %15 = vsyncadd [#allocation3], %s14
      %s16 = sshll.u32 [#allocation2], 4
      %s17 = int_to_ptr.vmem [resolvable:$true] %s16
      %22 = dma.hbm_to_vmem [thread:$0]  %s0, 128, %s17, [#allocation3], 64, 64, 4
    $region5: #{tpu_custom_call.1} parent=1 // pred_fallthru
      _
    // Predicated region
    $region6: #{tpu_custom_call.1} parent=1 // pred_check
      _
    $region7: #{tpu_custom_call.1} parent=1 // pred_check_branch
      %24 = sbr.rel (0) target = $region9
    $region8: #{tpu_custom_call.1} parent=1 // pred_region
      %s26 = ssub.s32 1024, 1024
      %27 = vsyncadd [#allocation6], %s26
      %s28 = sshll.u32 [#allocation5], 4
      %s29 = int_to_ptr.vmem [resolvable:$true] %s28
      %34 = dma.hbm_to_vmem [thread:$0]  %s1, 1024, %s29, [#allocation6], 64, 64, 4
    $region9: #{tpu_custom_call.1} parent=1 // pred_fallthru
      _
    // Predicated region
    $region10: #{tpu_custom_call.1} parent=1 // pred_check
      _
    $region11: #{tpu_custom_call.1} parent=1 // pred_check_branch
      %36 = sbr.rel (0) target = $region13
    $region12: #{tpu_custom_call.1} parent=1 // pred_region
      _
    $region13: #{tpu_custom_call.1} parent=1 // pred_fallthru
      _
    // Predicated region
    $region14: #{tpu_custom_call.1} parent=1 // pred_check
      _
    $region15: #{tpu_custom_call.1} parent=1 // pred_check_branch
      %38 = sbr.rel (0) target = $region17
    $region16: #{tpu_custom_call.1} parent=1 // pred_region
      %39 = dma.done [#allocation3], 128
    $region17: #{tpu_custom_call.1} parent=1 // pred_fallthru
      _
    // Predicated region
    $region18: #{tpu_custom_call.1} parent=1 // pred_check
      _
    $region19: #{tpu_custom_call.1} parent=1 // pred_check_branch
      %41 = sbr.rel (0) target = $region21
    $region20: #{tpu_custom_call.1} parent=1 // pred_region
      %42 = dma.done [#allocation6], 1024
    $region21: #{tpu_custom_call.1} parent=1 // pred_fallthru
      _
    %v44 = vld [vmem:[#allocation2] sm:$0xf]
    %v45 = vld [vmem:[#allocation2 + $0x4] sm:$0xf]
    %v46 = vld [vmem:[#allocation5] sm:$0xf]
    %v47 = vld [vmem:[#allocation5 + $0x4] sm:$0xf]
    %v48 = vld [vmem:[#allocation5 + $0x8] sm:$0xf]
    %v49 = vld [vmem:[#allocation5 + $0xc] sm:$0xf]
    %v50 = vld [vmem:[#allocation5 + $0x10] sm:$0xf]
    %v51 = vld [vmem:[#allocation5 + $0x14] sm:$0xf]
    %v52 = vld [vmem:[#allocation5 + $0x18] sm:$0xf]
    %v53 = vld [vmem:[#allocation5 + $0x1c] sm:$0xf]
    %v54 = vld [vmem:[#allocation5 + $0x20] sm:$0xf]
    %v55 = vld [vmem:[#allocation5 + $0x24] sm:$0xf]
    %v56 = vld [vmem:[#allocation5 + $0x28] sm:$0xf]
    %v57 = vld [vmem:[#allocation5 + $0x2c] sm:$0xf]
    %v58 = vld [vmem:[#allocation5 + $0x30] sm:$0xf]
    %v59 = vld [vmem:[#allocation5 + $0x34] sm:$0xf]
    %v60 = vld [vmem:[#allocation5 + $0x38] sm:$0xf]
    %v61 = vld [vmem:[#allocation5 + $0x3c] sm:$0xf]
    %v62 = vld [vmem:[%s2] sm:$0x1]
    %v64 = vlaneseq
    %v65 = vshrl.u32 %v64, 7
    %v66 = vsub.s32 0, %v65
    %v67 = vrot.slane %v62, %v66
    %v71 = vunpack.c.l.b16 %v44
    %v72 = vunpack.c.l.b16 %v45
    %v73 = vpack.c.b16 %v72, %v71
    %v91 = vunpack.c.l.b16 %v46
    %v92 = vunpack.c.l.b16 %v47
    %v93 = vunpack.c.l.b16 %v48
    %v94 = vunpack.c.l.b16 %v49
    %v95 = vunpack.c.l.b16 %v50
    %v96 = vunpack.c.l.b16 %v51
    %v97 = vunpack.c.l.b16 %v52
    %v98 = vunpack.c.l.b16 %v53
    %v99 = vunpack.c.l.b16 %v54
    %v100 = vunpack.c.l.b16 %v55
    %v101 = vunpack.c.l.b16 %v56
    %v102 = vunpack.c.l.b16 %v57
    %v103 = vunpack.c.l.b16 %v58
    %v104 = vunpack.c.l.b16 %v59
    %v105 = vunpack.c.l.b16 %v60
    %v106 = vunpack.c.l.b16 %v61
    %v107 = vpack.c.b16 %v92, %v91
    %v108 = vpack.c.b16 %v94, %v93
    %v109 = vpack.c.b16 %v96, %v95
    %v110 = vpack.c.b16 %v98, %v97
    %v111 = vpack.c.b16 %v100, %v99
    %v112 = vpack.c.b16 %v102, %v101
    %v113 = vpack.c.b16 %v104, %v103
    %v114 = vpack.c.b16 %v106, %v105
    %123 = vmatprep.subr.bf16.mxu0 0
    %124 = vmatpush1.bf16.msra.mxu0 %v107
    %125 = vmatprep.subr.bf16.mxu0 0
    %126 = vmatpush1.bf16.msra.mxu0 %v108
    %127 = vmatprep.subr.bf16.mxu0 0
    %128 = vmatpush1.bf16.msra.mxu0 %v109
    %129 = vmatprep.subr.bf16.mxu0 0
    %130 = vmatpush1.bf16.msra.mxu0 %v110
    %131 = vmatprep.subr.bf16.mxu0 0
    %132 = vmatpush1.bf16.msra.mxu0 %v111
    %133 = vmatprep.subr.bf16.mxu0 0
    %134 = vmatpush1.bf16.msra.mxu0 %v112
    %135 = vmatprep.subr.bf16.mxu0 0
    %136 = vmatpush1.bf16.msra.mxu0 %v113
    %137 = vmatprep.subr.bf16.mxu0 0
    %138 = vmatpush1.bf16.msra.mxu0 %v114
    %139 = vmatprep.subr.bf16.mxu0 0
    %140 = vmatpush1.bf16.msra.mxu0 0
    %141 = vmatprep.subr.bf16.mxu0 0
    %142 = vmatpush1.bf16.msra.mxu0 0
    %143 = vmatprep.subr.bf16.mxu0 0
    %144 = vmatpush1.bf16.msra.mxu0 0
    %145 = vmatprep.subr.bf16.mxu0 0
    %146 = vmatpush1.bf16.msra.mxu0 0
    %147 = vmatprep.subr.bf16.mxu0 0
    %148 = vmatpush1.bf16.msra.mxu0 0
    %149 = vmatprep.subr.bf16.mxu0 0
    %150 = vmatpush1.bf16.msra.mxu0 0
    %151 = vmatprep.subr.bf16.mxu0 0
    %152 = vmatpush1.bf16.msra.mxu0 0
    %153 = vmatprep.subr.bf16.mxu0 0
    %154 = vmatpush1.bf16.msra.mxu0 0
    %155 = vmatprep.mubr.bf16.mxu0 0
    %156 = vmatmul.mubr.bf16.gmra.mrb[0].mxu0 %v73
    %v157 = vpop.f32.mrb[0].mxu0
    %v158 = vadd.f32 %v67, %v157
    %v159 = vpop.f32.mrb[0].mxu0
    %v160 = vpop.f32.mrb[0].mxu0
    %v161 = vadd.f32 %v67, %v160
    %v162 = vpop.f32.mrb[0].mxu0
    %163 = vdwg.mxu0
    %164 = vst [vmem:[#allocation7] sm:$0xff] %v158
    %165 = vst [vmem:[#allocation7 + $0x8] sm:$0xff] %v161
    // Predicated region
    $region22: #{tpu_custom_call.1} parent=1 // pred_check
      _
    $region23: #{tpu_custom_call.1} parent=1 // pred_check_branch
      %167 = sbr.rel (0) target = $region25
    $region24: #{tpu_custom_call.1} parent=1 // pred_region
      %s169 = ssub.s32 256, 256
      %170 = vsyncadd [#allocation4], %s169
      %s171 = sshll.u32 [#allocation7], 4
      %s172 = int_to_ptr.vmem [resolvable:$true] %s171
      %177 = dma.vmem_to_hbm [thread:$0]  %s172, 256, %s3, [#allocation4], 128, 128, 8
    $region25: #{tpu_custom_call.1} parent=1 // pred_fallthru
      _
    // Predicated region
    $region26: #{tpu_custom_call.1} parent=1 // pred_check
      _
    $region27: #{tpu_custom_call.1} parent=1 // pred_check_branch
      %179 = sbr.rel (0) target = $region29
    $region28: #{tpu_custom_call.1} parent=1 // pred_region
      %180 = dma.done [#allocation4], 256
    $region29: #{tpu_custom_call.1} parent=1 // pred_fallthru
      _
    %181 = vsyncpa [#allocation3], 1
    %182 = vsyncpa [#allocation6], 1
    %183 = vsyncpa [#allocation4], 1

</llo_original>
